<compile_context>
chip_gen: v6e
topology: v6e:2x2x1
jax: 0.10.0
libtpu: 0.0.40
codegen_flags: <defaults>
</compile_context>

<pallas_src>
import functools
import math

import jax
import jax.numpy as jnp
from jax.experimental import pallas as pl
from jax.experimental.pallas import tpu as pltpu

LANE = 128
SUBLANE = 8
TILE = SUBLANE * LANE          # 1024 elements per (8,128) vreg tile
MAX_BLOCK_TILES = 256          # 256 tiles = 2048 rows x 128 lanes = 1 MiB f32 / block / input


def _charbonnier_kernel(x_ref, y_ref, o_ref, *, eps2, valid_tiles):
    s = pl.program_id(0)           # split ("parallel") axis — 2 TCs on v7x
    i = pl.program_id(1)           # reduction ("arbitrary") axis
    n_inner = pl.num_programs(1)

    # Output block (8,128) is resident across the inner axis: init at i == 0.
    @pl.when(i == 0)
    def _():
        o_ref[...] = jnp.zeros_like(o_ref)

    x = x_ref[...].astype(jnp.float32)
    y = y_ref[...].astype(jnp.float32)
    d = x - y
    v = jnp.sqrt(d * d + eps2)     # (bt, 8, 128)

    # Zero row-tiles that are logically past the end of the data (the partial
    # last block, and the clamped duplicate block of the 2-way split).
    bt = x_ref.shape[0]
    blk = s * n_inner + i
    tile_ids = blk * bt + jax.lax.broadcasted_iota(jnp.int32, (bt, 1, 1), 0)
    v = jnp.where(tile_ids < valid_tiles, v, 0.0)

    # VPU-only partial reduce over the leading (untiled) axis; the final
    # cross-lane/sublane reduce happens once in the wrapper.
    o_ref[...] += jnp.sum(v, axis=0)


def charbonnier(inputs, targets, epsilon=0.001):
    """Charbonnier loss: mean(sqrt((inputs - targets)^2 + eps^2)). Returns f32 scalar."""
    assert inputs.shape == targets.shape
    n = int(math.prod(inputs.shape))
    eps2 = float(epsilon) ** 2

    x = inputs.reshape(-1)
    y = targets.reshape(-1)

    # Only pad (a full-array copy) in the rare non-divisible case; the common
    # divisible case stays a free bitcast-reshape with no extra HBM traffic.
    pad = (-n) % TILE
    if pad:
        x = jnp.pad(x, (0, pad))
        y = jnp.pad(y, (0, pad))

    n_tiles = (n + pad) // TILE
    x3 = x.reshape(n_tiles, SUBLANE, LANE)
    y3 = y.reshape(n_tiles, SUBLANE, LANE)

    block_tiles = min(MAX_BLOCK_TILES, n_tiles)
    t_total = pl.cdiv(n_tiles, block_tiles)       # total row-tile blocks
    num_splits = 2 if t_total > 1 else 1          # one per TensorCore on v7x
    t_inner = pl.cdiv(t_total, num_splits)
    max_blk = t_total - 1

    def in_map(s, i):
        # Clamp so an over-covering grid (odd block count with the 2-way split)
        # never requests an out-of-bounds block; its rows are masked to zero.
        return (jnp.minimum(s * t_inner + i, max_blk), 0, 0)

    kernel = functools.partial(_charbonnier_kernel, eps2=eps2, valid_tiles=n_tiles)

    partial_sums = pl.pallas_call(
        kernel,
        out_shape=jax.ShapeDtypeStruct((num_splits * SUBLANE, LANE), jnp.float32),
        grid_spec=pltpu.PrefetchScalarGridSpec(
            num_scalar_prefetch=0,
            grid=(num_splits, t_inner),
            in_specs=[
                # NOTE: could add pipeline_mode=pl.Buffered(3) and sweep 2 vs 3.
                pl.BlockSpec((block_tiles, SUBLANE, LANE), in_map),
                pl.BlockSpec((block_tiles, SUBLANE, LANE), in_map),
            ],
            out_specs=pl.BlockSpec((SUBLANE, LANE), lambda s, i: (s, 0)),
        ),
        compiler_params=pltpu.CompilerParams(
            dimension_semantics=("parallel", "arbitrary"),
        ),
    )(x3, y3)

    total = jnp.sum(partial_sums)
    if pad:
        # Zero-padded elements each contributed exactly sqrt(0 + eps^2) = eps.
        total = total - pad * jnp.sqrt(jnp.float32(eps2))
    return total / jnp.float32(n)


if __name__ == "__main__":
    key = jax.random.PRNGKey(0)
    k1, k2, k3, k4, k5, k6 = jax.random.split(key, 6)

    # Primary small NCHW case: batch=2, channels=4, spatial=16x16.
    inputs = jax.random.normal(k1, (2, 4, 16, 16), dtype=jnp.float32)
    targets = jax.random.normal(k2, (2, 4, 16, 16), dtype=jnp.float32)
    loss = charbonnier(inputs, targets, epsilon=0.001)
    jax.block_until_ready(loss)
    ref = jnp.mean(jnp.sqrt((inputs - targets) ** 2 + 0.001 ** 2))
    assert jnp.allclose(loss, ref, rtol=1e-4, atol=1e-6), (loss, ref)

    # Ragged size: exercises the pad-tail (pad*eps correction) path.
    a = jax.random.normal(k3, (3, 5, 13, 17), dtype=jnp.float32)
    b = jax.random.normal(k4, (3, 5, 13, 17), dtype=jnp.float32)
    loss2 = charbonnier(a, b, epsilon=0.01)
    jax.block_until_ready(loss2)
    ref2 = jnp.mean(jnp.sqrt((a - b) ** 2 + 0.01 ** 2))
    assert jnp.allclose(loss2, ref2, rtol=1e-4, atol=1e-6), (loss2, ref2)

    # Larger case: exercises the 2-way split, the clamped duplicate block and
    # the partial tail block (640 tiles -> 3 blocks -> grid (2, 2)).
    c = jax.random.normal(k5, (10, 1, 256, 256), dtype=jnp.float32)
    d = jax.random.normal(k6, (10, 1, 256, 256), dtype=jnp.float32)
    loss3 = charbonnier(c, d, epsilon=0.001)
    jax.block_until_ready(loss3)
    ref3 = jnp.mean(jnp.sqrt((c - d) ** 2 + 0.001 ** 2))
    assert jnp.allclose(loss3, ref3, rtol=1e-4, atol=1e-6), (loss3, ref3)

    print("KERNEL_OK")
</pallas_src>

<mosaic_0001>
module attributes {stable_mosaic.version = 11 : i64} {
  func.func @_charbonnier_kernel(%arg0: i32, %arg1: i32, %arg2: memref<2x8x128xf32, #tpu.memory_space<vmem>>, %arg3: memref<2x8x128xf32, #tpu.memory_space<vmem>>, %arg4: memref<8x128xf32, #tpu.memory_space<vmem>>) attributes {dimension_semantics = [#tpu.dimension_semantics<parallel>, #tpu.dimension_semantics<arbitrary>], iteration_bounds = array<i64: 1, 1>, scalar_prefetch = 0 : i64, scratch_operands = 0 : i64, tpu.core_type = #tpu.core_type<tc>, window_params = [{transform_indices = @transform_0, window_bounds = array<i64: 2, 8, 128>}, {transform_indices = @transform_1, window_bounds = array<i64: 2, 8, 128>}, {transform_indices = @transform_2, window_bounds = array<i64: 8, 128>}]} {
    %c0_i32 = arith.constant 0 : i32
    %0 = arith.cmpi eq, %arg1, %c0_i32 : i32
    %1 = arith.extui %0 : i1 to i32
    %c0_i32_0 = arith.constant 0 : i32
    %2 = arith.cmpi ne, %1, %c0_i32_0 : i32
    scf.if %2 {
      %cst_13 = arith.constant 0.000000e+00 : f32
      %26 = vector.broadcast %cst_13 : f32 to vector<8x128xf32>
      %c0_14 = arith.constant 0 : index
      %c0_15 = arith.constant 0 : index
      %27 = vector.load %arg4[%c0_14, %c0_15] : memref<8x128xf32, #tpu.memory_space<vmem>>, vector<8x128xf32>
      tpu.vector_store %arg4[%c0_14, %c0_15], %26 {strides = array<i32>} : memref<8x128xf32, #tpu.memory_space<vmem>>, vector<8x128xf32>,
    } else {
    }
    %c0 = arith.constant 0 : index
    %c0_1 = arith.constant 0 : index
    %c0_2 = arith.constant 0 : index
    %3 = vector.load %arg2[%c0, %c0_1, %c0_2] : memref<2x8x128xf32, #tpu.memory_space<vmem>>, vector<2x8x128xf32>
    %c0_3 = arith.constant 0 : index
    %c0_4 = arith.constant 0 : index
    %c0_5 = arith.constant 0 : index
    %4 = vector.load %arg3[%c0_3, %c0_4, %c0_5] : memref<2x8x128xf32, #tpu.memory_space<vmem>>, vector<2x8x128xf32>
    %5 = arith.subf %3, %4 : vector<2x8x128xf32>
    %6 = arith.mulf %5, %5 : vector<2x8x128xf32>
    %cst = arith.constant 9.99999997E-7 : f32
    %7 = vector.broadcast %cst : f32 to vector<2x8x128xf32>
    %8 = arith.addf %6, %7 : vector<2x8x128xf32>
    %9 = math.sqrt %8 : vector<2x8x128xf32>
    %c1_i32 = arith.constant 1 : i32
    %10 = arith.muli %arg0, %c1_i32 : i32
    %11 = arith.addi %10, %arg1 : i32
    %c2_i32 = arith.constant 2 : i32
    %12 = arith.muli %11, %c2_i32 : i32
    %13 = tpu.iota {dimensions = array<i32: 0>} : vector<2x1x1xi32>
    %14 = vector.broadcast %12 : i32 to vector<2x1x1xi32>
    %15 = arith.addi %14, %13 : vector<2x1x1xi32>
    %c2_i32_6 = arith.constant 2 : i32
    %16 = vector.broadcast %c2_i32_6 : i32 to vector<2x1x1xi32>
    %17 = arith.cmpi slt, %15, %16 : vector<2x1x1xi32>
    %cst_7 = arith.constant 0.000000e+00 : f32
    %18 = vector.shape_cast %17 : vector<2x1x1xi1> to vector<2x1x1xi1>
    %19 = vector.broadcast %18 : vector<2x1x1xi1> to vector<2x8x128xi1>
    %20 = vector.broadcast %cst_7 : f32 to vector<2x8x128xf32>
    %21 = arith.select %19, %9, %20 : vector<2x8x128xi1>, vector<2x8x128xf32>
    %c0_8 = arith.constant 0 : index
    %c0_9 = arith.constant 0 : index
    %22 = vector.load %arg4[%c0_8, %c0_9] : memref<8x128xf32, #tpu.memory_space<vmem>>, vector<8x128xf32>
    %cst_10 = arith.constant dense<0.000000e+00> : vector<8x128xf32>
    %23 = vector.multi_reduction <add>, %21, %cst_10 [0] : vector<2x8x128xf32> to vector<8x128xf32>
    %24 = arith.addf %22, %23 : vector<8x128xf32>
    %c0_11 = arith.constant 0 : index
    %c0_12 = arith.constant 0 : index
    %25 = vector.load %arg4[%c0_11, %c0_12] : memref<8x128xf32, #tpu.memory_space<vmem>>, vector<8x128xf32>
    tpu.vector_store %arg4[%c0_11, %c0_12], %24 {strides = array<i32>} : memref<8x128xf32, #tpu.memory_space<vmem>>, vector<8x128xf32>,
    return
  }
  func.func @transform_0(%arg0: i32, %arg1: i32) -> (i32, i32, i32) {
    %c1_i32 = arith.constant 1 : i32
    %0 = arith.muli %arg0, %c1_i32 : i32
    %1 = arith.addi %0, %arg1 : i32
    %c0_i32 = arith.constant 0 : i32
    %2 = arith.minsi %1, %c0_i32 : i32
    %c0_i32_0 = arith.constant 0 : i32
    %c0_i32_1 = arith.constant 0 : i32
    %c0_i32_2 = arith.constant 0 : i32
    return %2, %c0_i32_0, %c0_i32_1 : i32, i32, i32
  }
  func.func @transform_1(%arg0: i32, %arg1: i32) -> (i32, i32, i32) {
    %c1_i32 = arith.constant 1 : i32
    %0 = arith.muli %arg0, %c1_i32 : i32
    %1 = arith.addi %0, %arg1 : i32
    %c0_i32 = arith.constant 0 : i32
    %2 = arith.minsi %1, %c0_i32 : i32
    %c0_i32_0 = arith.constant 0 : i32
    %c0_i32_1 = arith.constant 0 : i32
    %c0_i32_2 = arith.constant 0 : i32
    return %2, %c0_i32_0, %c0_i32_1 : i32, i32, i32
  }
  func.func @transform_2(%arg0: i32, %arg1: i32) -> (i32, i32) {
    %c0_i32 = arith.constant 0 : i32
    %c0_i32_0 = arith.constant 0 : i32
    return %arg0, %c0_i32 : i32, i32
  }
}

</mosaic_0001>

<llo_original>
// kernel: tpu_custom_call.1
$region0: #{tpu_custom_call.1}
  #allocation0 [shape = 'u32[]', space=smem, size = 0x4, offset = 0x4, fixed_abs, tag = 'smem constant byte address 0x4 - core index']
  #allocation1 [shape = 'u32[144,128]{1,0:T(1,128)}', space=vmem, size = 0x12000, scoped, tag = 'internal scratch']
  %s0 = inlined_call_operand.hbm [shape: f32[2,8,128], index: 0, kind: input, shape index: {}]
  %s1 = inlined_call_operand.hbm [shape: f32[2,8,128], index: 1, kind: input, shape index: {}]
  %s2 = inlined_call_operand.hbm [shape: f32[8,128], index: 2, kind: output, shape index: {}]
  %s3 = sld [smem:[#allocation0]]
  $region30: #{tpu_custom_call.1} parent=0
    _
  %s5 = ssub.s32 1, %s3
  %s6 = scalar_select 0, %s5, %s3
  $region1: #{tpu_custom_call.1} parent=0
    #allocation2 [shape = 'u8[8192]{0}', space=vmem, size = 0x2000, scoped, tag = 'input window, operand 0, single buffered']
    #allocation3 [shape = 's32[1]{0}', space=sflag, size = 0x4, scoped, tag = 'scoped memory for tpu_custom_call.1']
    #allocation4 [shape = 's32[1]{0}', space=sflag, size = 0x4, scoped, tag = 'scoped memory for tpu_custom_call.1']
    #allocation5 [shape = 'u8[8192]{0}', space=vmem, size = 0x2000, scoped, tag = 'input window, operand 1, single buffered']
    #allocation6 [shape = 's32[1]{0}', space=sflag, size = 0x4, scoped, tag = 'scoped memory for tpu_custom_call.1']
    #allocation7 [shape = 'u8[4096]{0}', space=vmem, size = 0x1000, scoped, tag = 'output window, operand 0, single buffered']
    %7 = vsyncpa [#allocation3], 0
    %8 = vsyncpa [#allocation6], 0
    %9 = vsyncpa [#allocation4], 0
    // Predicated region
    $region2: #{tpu_custom_call.1} parent=1 // pred_check
      _
    $region3: #{tpu_custom_call.1} parent=1 // pred_check_branch
      %11 = sbr.rel (0) target = $region5
    $region4: #{tpu_custom_call.1} parent=1 // pred_region
      %s12 = sadd.s32 0, 0
      %p13 = scmp.lt.s32.totalorder %s12, 0
      %s14 = scalar_select %p13, %s12, 0
      %s15 = smul.u32 2, %s14
      %s17 = ssub.s32 256, 256
      %18 = vsyncadd [#allocation3], %s17
      %s19 = smul.addr %s15, 128
      %s20 = scalar_lea.hbm %s0, %s19
      %s21 = sshll.u32 [#allocation2], 4
      %s22 = int_to_ptr.vmem [resolvable:$true] %s21
      %27 = dma.hbm_to_vmem [thread:$0]  %s20, 256, %s22, [#allocation3], 128, 128, 8
    $region5: #{tpu_custom_call.1} parent=1 // pred_fallthru
      _
    // Predicated region
    $region6: #{tpu_custom_call.1} parent=1 // pred_check
      _
    $region7: #{tpu_custom_call.1} parent=1 // pred_check_branch
      %29 = sbr.rel (0) target = $region9
    $region8: #{tpu_custom_call.1} parent=1 // pred_region
      %s30 = sadd.s32 0, 0
      %p31 = scmp.lt.s32.totalorder %s30, 0
      %s32 = scalar_select %p31, %s30, 0
      %s33 = smul.u32 2, %s32
      %s35 = ssub.s32 256, 256
      %36 = vsyncadd [#allocation6], %s35
      %s37 = smul.addr %s33, 128
      %s38 = scalar_lea.hbm %s1, %s37
      %s39 = sshll.u32 [#allocation5], 4
      %s40 = int_to_ptr.vmem [resolvable:$true] %s39
      %45 = dma.hbm_to_vmem [thread:$0]  %s38, 256, %s40, [#allocation6], 128, 128, 8
    $region9: #{tpu_custom_call.1} parent=1 // pred_fallthru
      _
    // Predicated region
    $region10: #{tpu_custom_call.1} parent=1 // pred_check
      _
    $region11: #{tpu_custom_call.1} parent=1 // pred_check_branch
      %47 = sbr.rel (0) target = $region13
    $region12: #{tpu_custom_call.1} parent=1 // pred_region
      %48 = dma.done [#allocation3], 256
    $region13: #{tpu_custom_call.1} parent=1 // pred_fallthru
      _
    // Predicated region
    $region14: #{tpu_custom_call.1} parent=1 // pred_check
      _
    $region15: #{tpu_custom_call.1} parent=1 // pred_check_branch
      %50 = sbr.rel (0) target = $region17
    $region16: #{tpu_custom_call.1} parent=1 // pred_region
      %51 = dma.done [#allocation6], 256
    $region17: #{tpu_custom_call.1} parent=1 // pred_fallthru
      _
    %s52 = sadd.s32 0, 0
    %p53 = scmp.lt.s32.totalorder %s52, 0
    %s54 = scalar_select %p53, %s52, 0
    %s55 = smul.u32 2, %s54
    %s56 = sadd.s32 0, 0
    %p57 = scmp.lt.s32.totalorder %s56, 0
    %s58 = scalar_select %p57, %s56, 0
    %s59 = smul.u32 2, %s58
    %p60 = scmp.eq.s32.totalorder 0, 0
    // Predicated region
    $region18: #{tpu_custom_call.1} parent=1 // pred_check
      %p61 = pneg %p60
    $region19: #{tpu_custom_call.1} parent=1 // pred_check_branch
      %63 = sbr.rel (%p61) target = $region21
    $region20: #{tpu_custom_call.1} parent=1 // pred_region
      %64 = vst [vmem:[#allocation7] sm:$0xff] 0.0
    $region21: #{tpu_custom_call.1} parent=1 // pred_fallthru
      _
    %v65 = vld [vmem:[#allocation2] sm:$0xff]
    %v66 = vld [vmem:[#allocation2 + $0x8] sm:$0xff]
    %v67 = vld [vmem:[#allocation5] sm:$0xff]
    %v68 = vld [vmem:[#allocation5 + $0x8] sm:$0xff]
    %v69 = vsub.f32 %v65, %v67
    %v70 = vsub.f32 %v66, %v68
    %v71 = vmul.f32 %v69, %v69
    %v72 = vmul.f32 %v70, %v70
    %v73 = vadd.f32 %v71, 1e-06
    %v74 = vadd.f32 %v72, 1e-06
    %v75 = vrsqrt.pop %v73
    %v76 = vmul.f32 %v73, %v75
    %vm77 = vcmp.eq.f32.partialorder %v73, inf
    %v78 = vsel %vm77, %v73, %v76
    %vm79 = vcmp.eq.f32.partialorder %v73, 0.0
    %v80 = vand.u32 %v73, 2147483648
    %v81 = vsel %vm79, %v80, %v78
    %v82 = vrsqrt.pop %v74
    %v83 = vmul.f32 %v74, %v82
    %vm84 = vcmp.eq.f32.partialorder %v74, inf
    %v85 = vsel %vm84, %v74, %v83
    %vm86 = vcmp.eq.f32.partialorder %v74, 0.0
    %v87 = vand.u32 %v74, 2147483648
    %v88 = vsel %vm86, %v87, %v85
    %s89 = sadd.s32 0, 0
    %s90 = smul.u32 %s89, 2
    %v91 = vstv %s90
    %v92 = vadd.s32 %v91, 1
    %vm93 = vcmp.lt.s32.totalorder %v91, 2
    %vm94 = vcmp.lt.s32.totalorder %v92, 2
    %v95 = vsel %vm93, 1, 0
    %v96 = vsel %vm94, 1, 0
    %vm97 = vcmp.eq.s32.totalorder %v95, 1
    %vm98 = vcmp.eq.s32.totalorder %v96, 1
    %v99 = vsel %vm97, %v81, 0.0
    %v100 = vsel %vm98, %v88, 0.0
    %v101 = vld [vmem:[#allocation7] sm:$0xff]
    %v102 = vadd.f32 %v99, %v100
    %v103 = vadd.f32 %v101, %v102
    %104 = vst [vmem:[#allocation7] sm:$0xff] %v103
    // Predicated region
    $region22: #{tpu_custom_call.1} parent=1 // pred_check
      _
    $region23: #{tpu_custom_call.1} parent=1 // pred_check_branch
      %106 = sbr.rel (0) target = $region25
    $region24: #{tpu_custom_call.1} parent=1 // pred_region
      %s108 = ssub.s32 128, 128
      %109 = vsyncadd [#allocation4], %s108
      %s111 = sshll.u32 [#allocation7], 4
      %s112 = int_to_ptr.vmem [resolvable:$true] %s111
      %114 = dma.vmem_to_hbm [thread:$0]  %s112, 128, %s2, [#allocation4]
    $region25: #{tpu_custom_call.1} parent=1 // pred_fallthru
      _
    // Predicated region
    $region26: #{tpu_custom_call.1} parent=1 // pred_check
      _
    $region27: #{tpu_custom_call.1} parent=1 // pred_check_branch
      %116 = sbr.rel (0) target = $region29
    $region28: #{tpu_custom_call.1} parent=1 // pred_region
      %117 = dma.done [#allocation4], 128
    $region29: #{tpu_custom_call.1} parent=1 // pred_fallthru
      _
    %118 = vsyncpa [#allocation3], 1
    %119 = vsyncpa [#allocation6], 1
    %120 = vsyncpa [#allocation4], 1

</llo_original>
